<compile_context>
chip_gen: v7x
topology: tpu7x:2x2x1
jax: 0.10.0
libtpu: 0.0.40
codegen_flags: <defaults>
</compile_context>

<pallas_src>
import functools

import jax
import jax.numpy as jnp
from jax.experimental import pallas as pl
from jax.experimental.pallas import tpu as pltpu


def _round_up(x: int, m: int) -> int:
    return (x + m - 1) // m * m


def _vmem_capacity_bytes() -> int:
    """Physical VMEM per core; conservative 64 MiB (v7x) if the query fails."""
    try:
        return int(pltpu.get_tpu_info().vmem_capacity_bytes)
    except Exception:
        return 64 * 1024 * 1024


def _divisor_tile(dim: int, preferred: int, granule: int = 128) -> int:
    """Largest multiple of `granule` dividing `dim` that is <= `preferred`.

    Falls back to `dim` (untiled) only when no such divisor exists.
    """
    if dim <= preferred:
        return dim
    if dim % granule:
        # TODO(synk): ragged K/N weight tiles would need in-kernel masking.
        return dim
    t = (preferred // granule) * granule
    while t >= granule:
        if dim % t == 0:
            return t
        t -= granule
    return dim


def _block_spec(shape, index_map, single_buffer: bool):
    if single_buffer:
        return pl.BlockSpec(shape, index_map, pipeline_mode=pl.Buffered(1))
    return pl.BlockSpec(shape, index_map)


def _silu(y):
    # exp + approx reciprocal both live on the EUP slot (hidden under MXU/VPU work).
    return y * pl.reciprocal(1.0 + jnp.exp(-y), approx=True)


def _fused_kernel(x_ref, wt_ref, b_ref, o_ref, *, compute_dtype):
    """Single pass: whole W resident, x streamed once, no accumulator scratch."""
    xv = x_ref[...]
    y = jnp.dot(xv.astype(compute_dtype), wt_ref[...],
                preferred_element_type=jnp.float32) + b_ref[...]
    o_ref[...] = (xv.astype(jnp.float32) + _silu(y)).astype(o_ref.dtype)


def _tiled_kernel(xk_ref, wt_ref, b_ref, xres_ref, o_ref, acc_ref, *, compute_dtype):
    """Grid (i, j, k): acc[i,j] (init = bias) += x[i,k] @ W.T[k,j]; epilogue at last k."""
    k = pl.program_id(2)

    @pl.when(k == 0)
    def _():
        acc_ref[...] = jnp.broadcast_to(b_ref[...], acc_ref.shape)

    acc_ref[...] += jnp.dot(xk_ref[...].astype(compute_dtype), wt_ref[...],
                            preferred_element_type=jnp.float32)

    @pl.when(k == pl.num_programs(2) - 1)
    def _():
        y = acc_ref[...]
        o_ref[...] = (xres_ref[...].astype(jnp.float32) + _silu(y)).astype(o_ref.dtype)


def _tiled_kernel_single_k(xk_ref, wt_ref, b_ref, xres_ref, o_ref, *, compute_dtype):
    """K untiled: no accumulator scratch; dot + epilogue written directly."""
    y = jnp.dot(xk_ref[...].astype(compute_dtype), wt_ref[...],
                preferred_element_type=jnp.float32) + b_ref[...]
    o_ref[...] = (xres_ref[...].astype(jnp.float32) + _silu(y)).astype(o_ref.dtype)


def resblock(x, w, b, *, tm=None, tn=None, tk=None, compute_dtype=jnp.bfloat16):
    """out = x + silu(x @ w.T + b).

    x: [M, H]; w: [H, H] (PyTorch nn.Linear weight layout); b: [H].
    Output dtype follows x (pass bf16 activations to halve residual/output HBM traffic).
    """
    M, H = x.shape
    assert w.shape == (H, H) and b.shape == (H,)
    out_dtype = x.dtype
    x_b = jnp.dtype(x.dtype).itemsize
    o_b = jnp.dtype(out_dtype).itemsize
    cb = jnp.dtype(compute_dtype).itemsize

    cap = _vmem_capacity_bytes()
    budget = int(0.60 * cap)        # budget for (double-buffered) tile bytes
    vmem_limit = int(0.75 * cap)    # scoped-VMEM limit handed to Mosaic

    Mr = _round_up(max(M, 8), 8)
    wt = w.T.astype(compute_dtype)               # one-time transpose, outside the kernel
    b2d = b.reshape(1, H).astype(jnp.float32)

    # ------------------------- fused single-pass variant -------------------------
    def fused_bytes(t):
        return 2 * H * H * cb + 2 * H * 4 + 2 * t * H * x_b + 2 * t * H * o_b

    tm_f = _round_up(min(tm or 2048, Mr), 8)
    while fused_bytes(tm_f) > budget and tm_f > 64:
        tm_f = _round_up(max(tm_f // 2, 8), 8)
    use_fused = (tn is None) and (tk is None) and fused_bytes(tm_f) <= budget

    if use_fused:
        # Megacore guard: give the single parallel axis >= 2 blocks when possible.
        # Cheap here: the weight/bias block index is constant, so splitting rows
        # adds no HBM re-streaming.
        if pl.cdiv(M, tm_f) < 2 and Mr >= 16:
            tm_f = _round_up(pl.cdiv(Mr, 2), 8)
        grid = (pl.cdiv(M, tm_f),)
        kernel = functools.partial(_fused_kernel, compute_dtype=compute_dtype)

        def in_specs(sb):
            return [
                pl.BlockSpec((tm_f, H), lambda i: (i, 0)),       # x: matmul LHS + residual
                _block_spec((H, H), lambda i: (0, 0), sb),       # W.T, resident
                _block_spec((1, H), lambda i: (0, 0), sb),       # bias, resident
            ]

        out_spec = pl.BlockSpec((tm_f, H), lambda i: (i, 0))
        scratch = ()
        dims = ("parallel",)
        operands = (x, wt, b2d)
        cost = pl.CostEstimate(
            flops=2 * M * H * H,
            transcendentals=2 * M * H,
            bytes_accessed=M * H * x_b + H * H * cb + M * H * o_b + H * 4)
    # ------------------------------ tiled variant --------------------------------
    else:
        tn_t = _divisor_tile(H, tn or 2048)
        tk_t = _divisor_tile(H, tk or 1024)
        single_k = (H // tk_t) == 1
        # Pre-cast the LHS to bf16 only when it is re-streamed enough times for the
        # extra wrapper pass to pay off; otherwise cast each tile in-kernel.
        precast = (H // tn_t) > 2 and jnp.dtype(x.dtype) != jnp.dtype(compute_dtype)
        lhs = x.astype(compute_dtype) if precast else x
        lhs_b = jnp.dtype(lhs.dtype).itemsize

        def tiled_bytes(t):
            return (2 * t * tk_t * lhs_b            # LHS tiles
                    + 2 * tk_t * tn_t * cb          # weight tiles
                    + 2 * tn_t * 4                  # bias
                    + 2 * t * tn_t * x_b            # residual
                    + 2 * t * tn_t * o_b            # output
                    + (0 if single_k else t * tn_t * 4))   # f32 accumulator

        tm_t = _round_up(min(tm or 2048, Mr), 8)
        while tiled_bytes(tm_t) > budget and tm_t > 64:
            tm_t = _round_up(max(tm_t // 2, 8), 8)

        grid = (pl.cdiv(M, tm_t), H // tn_t, H // tk_t)
        if single_k:
            kernel = functools.partial(_tiled_kernel_single_k, compute_dtype=compute_dtype)
            scratch = ()
        else:
            kernel = functools.partial(_tiled_kernel, compute_dtype=compute_dtype)
            scratch = (pltpu.VMEM((tm_t, tn_t), jnp.float32),)

        def in_specs(sb):
            return [
                pl.BlockSpec((tm_t, tk_t), lambda i, j, k: (i, k)),     # LHS tile
                pl.BlockSpec((tk_t, tn_t), lambda i, j, k: (k, j)),     # W.T tile
                _block_spec((1, tn_t), lambda i, j, k: (0, j), sb),     # bias (k-invariant)
                _block_spec((tm_t, tn_t), lambda i, j, k: (i, j), sb),  # residual (k-invariant)
            ]

        out_spec = pl.BlockSpec((tm_t, tn_t), lambda i, j, k: (i, j))
        dims = ("parallel", "parallel", "arbitrary")
        operands = (lhs, wt, b2d, x)
        gi = pl.cdiv(M, tm_t)
        cost = pl.CostEstimate(
            flops=2 * M * H * H,
            transcendentals=2 * M * H,
            bytes_accessed=((H // tn_t) * M * H * lhs_b    # LHS re-streamed H/tn times
                            + gi * H * H * cb              # W re-streamed M/tm times
                            + M * H * x_b + M * H * o_b + gi * H * 4))

    def run(single_buffer: bool):
        call = pl.pallas_call(
            kernel,
            out_shape=jax.ShapeDtypeStruct((M, H), out_dtype),
            grid_spec=pltpu.PrefetchScalarGridSpec(
                num_scalar_prefetch=0,
                grid=grid,
                in_specs=in_specs(single_buffer),
                out_specs=out_spec,
                scratch_shapes=scratch,
            ),
            compiler_params=pltpu.CompilerParams(
                dimension_semantics=dims,
                vmem_limit_bytes=vmem_limit,
            ),
            cost_estimate=cost,
        )
        return call(*operands)

    try:
        return run(True)
    except Exception:
        # pl.Buffered(1) single-buffering unsupported on this jax/libtpu build:
        # fall back to default double-buffering (same semantics, a bit more VMEM).
        return run(False)


if __name__ == "__main__":
    # Small shapes implied by the module: batch=2, seq=8, hidden=32.
    batch, seq, hidden = 2, 8, 32
    key = jax.random.PRNGKey(0)
    kx, kw, kb = jax.random.split(key, 3)

    x = jax.random.normal(kx, (batch, seq, hidden), dtype=jnp.float32)
    # The module zero-inits the weight, but the forward must hold for any W;
    # use a random weight so the MXU path (x @ W.T) is actually exercised.
    w = jax.random.normal(kw, (hidden, hidden), dtype=jnp.float32) * 0.05
    b = jax.random.normal(kb, (hidden,), dtype=jnp.float32) * 0.1

    cd = jnp.bfloat16
    x2d = x.reshape(batch * seq, hidden)

    def ref_fn(xm, wm, bm):
        y = jnp.dot(xm.astype(cd), wm.astype(cd).T,
                    preferred_element_type=jnp.float32) + bm
        return xm + y * jax.nn.sigmoid(y)

    # 1) Module-sized shape (fused single-pass path).
    out = resblock(x2d, w, b, compute_dtype=cd).reshape(batch, seq, hidden)
    jax.block_until_ready(out)
    assert jnp.allclose(out, ref_fn(x2d, w, b).reshape(batch, seq, hidden),
                        atol=5e-3, rtol=5e-3), "mismatch (fused path)"

    # 2) Zero-initialized weight, exactly the module's __init__.
    w0 = jnp.zeros((hidden, hidden), dtype=jnp.float32)
    out0 = resblock(x2d, w0, b, compute_dtype=cd)
    assert jnp.allclose(out0, ref_fn(x2d, w0, b), atol=5e-3, rtol=5e-3), \
        "mismatch (zero-weight)"

    # 3) Ragged M (no wrapper padding) + tiled N/K accumulator path.
    M2, H2 = 300, 256
    kx2, kw2, kb2 = jax.random.split(jax.random.PRNGKey(1), 3)
    x2 = jax.random.normal(kx2, (M2, H2), dtype=jnp.float32)
    w2 = jax.random.normal(kw2, (H2, H2), dtype=jnp.float32) * 0.02
    b2 = jax.random.normal(kb2, (H2,), dtype=jnp.float32) * 0.1
    o2 = resblock(x2, w2, b2, tn=128, tk=128, compute_dtype=cd)
    jax.block_until_ready(o2)
    assert jnp.allclose(o2, ref_fn(x2, w2, b2), atol=5e-3, rtol=5e-3), \
        "mismatch (tiled accumulator path)"

    # 4) K untiled: accumulator-free tiled variant.
    o3 = resblock(x2, w2, b2, tn=128, tk=256, compute_dtype=cd)
    jax.block_until_ready(o3)
    assert jnp.allclose(o3, ref_fn(x2, w2, b2), atol=5e-3, rtol=5e-3), \
        "mismatch (single-K tiled path)"

    print("KERNEL_OK")
</pallas_src>

<mosaic_0001>
module attributes {stable_mosaic.version = 11 : i64} {
  func.func @_fused_kernel(%arg0: i32, %arg1: memref<8x32xf32, #tpu.memory_space<vmem>>, %arg2: memref<32x32xbf16, #tpu.memory_space<vmem>>, %arg3: memref<1x32xf32, #tpu.memory_space<vmem>>, %arg4: memref<8x32xf32, #tpu.memory_space<vmem>>) attributes {dimension_semantics = [#tpu.dimension_semantics<parallel>], iteration_bounds = array<i64: 2>, scalar_prefetch = 0 : i64, scratch_operands = 0 : i64, tpu.core_type = #tpu.core_type<tc>, window_params = [{transform_indices = @transform_0, window_bounds = array<i64: 8, 32>}, {pipeline_mode = #tpu.pipeline_mode<synchronous>, transform_indices = @transform_1, window_bounds = array<i64: 32, 32>}, {pipeline_mode = #tpu.pipeline_mode<synchronous>, transform_indices = @transform_2, window_bounds = array<i64: 1, 32>}, {transform_indices = @transform_3, window_bounds = array<i64: 8, 32>}]} {
    %c0 = arith.constant 0 : index
    %c0_0 = arith.constant 0 : index
    %0 = vector.load %arg1[%c0, %c0_0] : memref<8x32xf32, #tpu.memory_space<vmem>>, vector<8x32xf32>
    %1 = arith.truncf %0 : vector<8x32xf32> to vector<8x32xbf16>
    %c0_1 = arith.constant 0 : index
    %c0_2 = arith.constant 0 : index
    %2 = vector.load %arg2[%c0_1, %c0_2] : memref<32x32xbf16, #tpu.memory_space<vmem>>, vector<32x32xbf16>
    %cst = arith.constant dense<0.000000e+00> : vector<8x32xf32>
    %3 = tpu.matmul %1, %2, %cst {dimension_numbers = #tpu.dot_dimension_numbers<[1], [0], [0], [1], [0, 0, 1, 1], [], []>} : vector<8x32xbf16>, vector<32x32xbf16>, vector<8x32xf32> -> vector<8x32xf32>
    %c0_3 = arith.constant 0 : index
    %c0_4 = arith.constant 0 : index
    %4 = vector.load %arg3[%c0_3, %c0_4] : memref<1x32xf32, #tpu.memory_space<vmem>>, vector<1x32xf32>
    %5 = vector.broadcast %4 : vector<1x32xf32> to vector<8x32xf32>
    %6 = arith.addf %3, %5 : vector<8x32xf32>
    %cst_5 = arith.constant 0.000000e+00 : f32
    %7 = vector.broadcast %cst_5 : f32 to vector<8x32xf32>
    %8 = arith.subf %7, %6 : vector<8x32xf32>
    %9 = math.exp %8 : vector<8x32xf32>
    %cst_6 = arith.constant 1.000000e+00 : f32
    %10 = vector.broadcast %cst_6 : f32 to vector<8x32xf32>
    %11 = arith.addf %10, %9 : vector<8x32xf32>
    %12 = tpu.reciprocal %11 {approx = true} : vector<8x32xf32> -> vector<8x32xf32>
    %13 = arith.mulf %6, %12 : vector<8x32xf32>
    %14 = arith.addf %0, %13 : vector<8x32xf32>
    %c0_7 = arith.constant 0 : index
    %c0_8 = arith.constant 0 : index
    %15 = vector.load %arg4[%c0_7, %c0_8] : memref<8x32xf32, #tpu.memory_space<vmem>>, vector<8x32xf32>
    tpu.vector_store %arg4[%c0_7, %c0_8], %14 {strides = array<i32>} : memref<8x32xf32, #tpu.memory_space<vmem>>, vector<8x32xf32>,
    return
  }
  func.func @transform_0(%arg0: i32) -> (i32, i32) {
    %c0_i32 = arith.constant 0 : i32
    %c0_i32_0 = arith.constant 0 : i32
    return %arg0, %c0_i32 : i32, i32
  }
  func.func @transform_1(%arg0: i32) -> (i32, i32) {
    %c0_i32 = arith.constant 0 : i32
    %c0_i32_0 = arith.constant 0 : i32
    %c0_i32_1 = arith.constant 0 : i32
    return %c0_i32, %c0_i32_0 : i32, i32
  }
  func.func @transform_2(%arg0: i32) -> (i32, i32) {
    %c0_i32 = arith.constant 0 : i32
    %c0_i32_0 = arith.constant 0 : i32
    %c0_i32_1 = arith.constant 0 : i32
    return %c0_i32, %c0_i32_0 : i32, i32
  }
  func.func @transform_3(%arg0: i32) -> (i32, i32) {
    %c0_i32 = arith.constant 0 : i32
    %c0_i32_0 = arith.constant 0 : i32
    return %arg0, %c0_i32 : i32, i32
  }
}

module attributes {stable_mosaic.version = 11 : i64} {
  func.func @_fused_kernel(%arg0: i32, %arg1: memref<8x32xf32, #tpu.memory_space<vmem>>, %arg2: memref<32x32xbf16, #tpu.memory_space<vmem>>, %arg3: memref<1x32xf32, #tpu.memory_space<vmem>>, %arg4: memref<8x32xf32, #tpu.memory_space<vmem>>) attributes {dimension_semantics = [#tpu.dimension_semantics<parallel>], iteration_bounds = array<i64: 2>, scalar_prefetch = 0 : i64, scratch_operands = 0 : i64, tpu.core_type = #tpu.core_type<tc>, window_params = [{transform_indices = @transform_0, window_bounds = array<i64: 8, 32>}, {pipeline_mode = #tpu.pipeline_mode<synchronous>, transform_indices = @transform_1, window_bounds = array<i64: 32, 32>}, {pipeline_mode = #tpu.pipeline_mode<synchronous>, transform_indices = @transform_2, window_bounds = array<i64: 1, 32>}, {transform_indices = @transform_3, window_bounds = array<i64: 8, 32>}]} {
    %c0 = arith.constant 0 : index
    %c0_0 = arith.constant 0 : index
    %0 = vector.load %arg1[%c0, %c0_0] : memref<8x32xf32, #tpu.memory_space<vmem>>, vector<8x32xf32>
    %1 = arith.truncf %0 : vector<8x32xf32> to vector<8x32xbf16>
    %c0_1 = arith.constant 0 : index
    %c0_2 = arith.constant 0 : index
    %2 = vector.load %arg2[%c0_1, %c0_2] : memref<32x32xbf16, #tpu.memory_space<vmem>>, vector<32x32xbf16>
    %cst = arith.constant dense<0.000000e+00> : vector<8x32xf32>
    %3 = tpu.matmul %1, %2, %cst {dimension_numbers = #tpu.dot_dimension_numbers<[1], [0], [0], [1], [0, 0, 1, 1], [], []>} : vector<8x32xbf16>, vector<32x32xbf16>, vector<8x32xf32> -> vector<8x32xf32>
    %c0_3 = arith.constant 0 : index
    %c0_4 = arith.constant 0 : index
    %4 = vector.load %arg3[%c0_3, %c0_4] : memref<1x32xf32, #tpu.memory_space<vmem>>, vector<1x32xf32>
    %5 = vector.broadcast %4 : vector<1x32xf32> to vector<8x32xf32>
    %6 = arith.addf %3, %5 : vector<8x32xf32>
    %cst_5 = arith.constant 0.000000e+00 : f32
    %7 = vector.broadcast %cst_5 : f32 to vector<8x32xf32>
    %8 = arith.subf %7, %6 : vector<8x32xf32>
    %9 = math.exp %8 : vector<8x32xf32>
    %cst_6 = arith.constant 1.000000e+00 : f32
    %10 = vector.broadcast %cst_6 : f32 to vector<8x32xf32>
    %11 = arith.addf %10, %9 : vector<8x32xf32>
    %12 = tpu.reciprocal %11 {approx = true} : vector<8x32xf32> -> vector<8x32xf32>
    %13 = arith.mulf %6, %12 : vector<8x32xf32>
    %14 = arith.addf %0, %13 : vector<8x32xf32>
    %c0_7 = arith.constant 0 : index
    %c0_8 = arith.constant 0 : index
    %15 = vector.load %arg4[%c0_7, %c0_8] : memref<8x32xf32, #tpu.memory_space<vmem>>, vector<8x32xf32>
    tpu.vector_store %arg4[%c0_7, %c0_8], %14 {strides = array<i32>} : memref<8x32xf32, #tpu.memory_space<vmem>>, vector<8x32xf32>,
    return
  }
  func.func @transform_0(%arg0: i32) -> (i32, i32) {
    %c0_i32 = arith.constant 0 : i32
    %c0_i32_0 = arith.constant 0 : i32
    return %arg0, %c0_i32 : i32, i32
  }
  func.func @transform_1(%arg0: i32) -> (i32, i32) {
    %c0_i32 = arith.constant 0 : i32
    %c0_i32_0 = arith.constant 0 : i32
    %c0_i32_1 = arith.constant 0 : i32
    return %c0_i32, %c0_i32_0 : i32, i32
  }
  func.func @transform_2(%arg0: i32) -> (i32, i32) {
    %c0_i32 = arith.constant 0 : i32
    %c0_i32_0 = arith.constant 0 : i32
    %c0_i32_1 = arith.constant 0 : i32
    return %c0_i32, %c0_i32_0 : i32, i32
  }
  func.func @transform_3(%arg0: i32) -> (i32, i32) {
    %c0_i32 = arith.constant 0 : i32
    %c0_i32_0 = arith.constant 0 : i32
    return %arg0, %c0_i32 : i32, i32
  }
}

</mosaic_0001>

<llo_original>
// kernel: tpu_custom_call.1
$region0: #{tpu_custom_call.1}
  #allocation0 [shape = 'u32[]', space=smem, size = 0x4, offset = 0x4, fixed_abs, tag = 'smem constant byte address 0x4 - core index']
  #allocation1 [shape = 'u32[144,128]{1,0:T(1,128)}', space=vmem, size = 0x12000, scoped, tag = 'internal scratch']
  %s0 = inlined_call_operand.hbm [shape: f32[16,32], index: 0, kind: input, shape index: {}]
  %s1 = inlined_call_operand.hbm [shape: bf16[32,32], index: 1, kind: input, shape index: {}]
  %s2 = inlined_call_operand.vmem [shape: f32[1,32], index: 2, kind: input, shape index: {}]
  %s3 = inlined_call_operand.hbm [shape: f32[16,32], index: 3, kind: output, shape index: {}]
  %s4 = sld [smem:[#allocation0]]
  $region53: #{tpu_custom_call.1} parent=0
    _
  %s6 = ssub.s32 1, %s4
  %s7 = scalar_select 0, %s6, %s4
  $region1: #{tpu_custom_call.1} parent=0
    #allocation2 [shape = 'u8[8192]{0}', space=vmem, size = 0x2000, scoped, tag = 'input window, operand 0']
    #allocation3 [shape = 's32[2]{0}', space=sflag, size = 0x8, scoped, tag = 'scoped memory for tpu_custom_call.1']
    #allocation4 [shape = 's32[2]{0}', space=sflag, size = 0x8, scoped, tag = 'scoped memory for tpu_custom_call.1']
    #allocation5 [shape = 'u8[8192]{0}', space=vmem, size = 0x2000, scoped, tag = 'input window, operand 1, single buffered']
    #allocation6 [shape = 's32[1]{0}', space=sflag, size = 0x4, scoped, tag = 'scoped memory for tpu_custom_call.1']
    #allocation7 [shape = 'u8[8192]{0}', space=vmem, size = 0x2000, scoped, tag = 'output window, operand 0']
    %8 = vsyncpa [#allocation3], 0
    %s9 = scalar_lea.sflag [#allocation3], 1
    %10 = vsyncpa %s9, 0
    %11 = vsyncpa [#allocation6], 0
    %12 = vsyncpa [#allocation4], 0
    %s13 = scalar_lea.sflag [#allocation4], 1
    %14 = vsyncpa %s13, 0
    loop: start=0, step=1, limit=4
    $region2: #{tpu_custom_call.1} parent=1 // loop_pre_header
      _
    $region3: #{tpu_custom_call.1} parent=1 // loop_header
      %s16 = sphi 0, %s20
      %p17 = scmp.ge.s32.totalorder %s16, 4
      %s26 = sphi 0, %s28
      %s29 = sphi 0, %s26
      %s30 = sphi 0, %s29
      %s46 = sphi 0, %s30
      %s50 = sphi 0, %s50
      %s52 = sphi 0, %s50
      %s53 = sphi 0, %s52
      %s67 = sphi 0, %s53
      %s71 = sphi 0, %s71
      %s73 = sphi 0, %s71
      %s74 = sphi 0, %s73
      %s88 = sphi 0, %s74
      %s94 = sphi 0, %s96
      %s97 = sphi 0, %s94
      %s98 = sphi 0, %s97
      %s114 = sphi 0, %s98
    $region4: #{tpu_custom_call.1} parent=1 // loop_header_branch
      %19 = sbr.rel (%p17) target = $region8
    $region5: #{tpu_custom_call.1} parent=1 // loop_body
      %s21 = ssub.s32 %s16, 1
      %s22 = ssub.s32 %s16, 2
      %s23 = sadd.s32 %s16, 1
      %s24 = ssub.s32 %s16, %s23
      %p25 = scmp.eq.s32.totalorder %s24, 0
      %s27 = sadd.s32 %s26, 1
      %s28 = scalar_select %p25, %s26, %s27
      %p31 = pneg %p25
      %p32 = scmp.eq.s32.totalorder %s16, 1
      %p33 = por %p31, %p32
      %p34 = scmp.ne.s32.totalorder %s26, %s29
      %p35 = scmp.eq.s32.totalorder %s16, 0
      %p36 = por %p34, %p35
      %p37 = scmp.ne.s32.totalorder %s26, %s29
      %p38 = scmp.eq.s32.totalorder %s21, 1
      %p39 = por %p37, %p38
      %p40 = scmp.ne.s32.totalorder %s29, %s30
      %p41 = scmp.eq.s32.totalorder %s21, 0
      %p42 = por %p40, %p41
      %p43 = scmp.ne.s32.totalorder %s29, %s30
      %p44 = scmp.eq.s32.totalorder %s22, 1
      %p45 = por %p43, %p44
      %p47 = scmp.ne.s32.totalorder %s30, %s46
      %p48 = scmp.eq.s32.totalorder %s22, 0
      %p49 = por %p47, %p48
      %s51 = sadd.s32 %s50, 1
      %p54 = scmp.eq.s32.totalorder %s16, 1
      %p55 = scmp.ne.s32.totalorder %s50, %s52
      %p56 = scmp.eq.s32.totalorder %s16, 0
      %p57 = por %p55, %p56
      %p58 = scmp.ne.s32.totalorder %s50, %s52
      %p59 = scmp.eq.s32.totalorder %s21, 1
      %p60 = por %p58, %p59
      %p61 = scmp.ne.s32.totalorder %s52, %s53
      %p62 = scmp.eq.s32.totalorder %s21, 0
      %p63 = por %p61, %p62
      %p64 = scmp.ne.s32.totalorder %s52, %s53
      %p65 = scmp.eq.s32.totalorder %s22, 1
      %p66 = por %p64, %p65
      %p68 = scmp.ne.s32.totalorder %s53, %s67
      %p69 = scmp.eq.s32.totalorder %s22, 0
      %p70 = por %p68, %p69
      %s72 = sadd.s32 %s71, 1
      %p75 = scmp.eq.s32.totalorder %s16, 1
      %p76 = scmp.ne.s32.totalorder %s71, %s73
      %p77 = scmp.eq.s32.totalorder %s16, 0
      %p78 = por %p76, %p77
      %p79 = scmp.ne.s32.totalorder %s71, %s73
      %p80 = scmp.eq.s32.totalorder %s21, 1
      %p81 = por %p79, %p80
      %p82 = scmp.ne.s32.totalorder %s73, %s74
      %p83 = scmp.eq.s32.totalorder %s21, 0
      %p84 = por %p82, %p83
      %p85 = scmp.ne.s32.totalorder %s73, %s74
      %p86 = scmp.eq.s32.totalorder %s22, 1
      %p87 = por %p85, %p86
      %p89 = scmp.ne.s32.totalorder %s74, %s88
      %p90 = scmp.eq.s32.totalorder %s22, 0
      %p91 = por %p89, %p90
      %s92 = ssub.s32 %s16, %s23
      %p93 = scmp.eq.s32.totalorder %s92, 0
      %s95 = sadd.s32 %s94, 1
      %s96 = scalar_select %p93, %s94, %s95
      %p99 = pneg %p93
      %p100 = scmp.eq.s32.totalorder %s16, 1
      %p101 = por %p99, %p100
      %p102 = scmp.ne.s32.totalorder %s94, %s97
      %p103 = scmp.eq.s32.totalorder %s16, 0
      %p104 = por %p102, %p103
      %p105 = scmp.ne.s32.totalorder %s94, %s97
      %p106 = scmp.eq.s32.totalorder %s21, 1
      %p107 = por %p105, %p106
      %p108 = scmp.ne.s32.totalorder %s97, %s98
      %p109 = scmp.eq.s32.totalorder %s21, 0
      %p110 = por %p108, %p109
      %p111 = scmp.ne.s32.totalorder %s97, %s98
      %p112 = scmp.eq.s32.totalorder %s22, 1
      %p113 = por %p111, %p112
      %p115 = scmp.ne.s32.totalorder %s98, %s114
      %p116 = scmp.eq.s32.totalorder %s22, 0
      %p117 = por %p115, %p116
      %p118 = scmp.le.s32.totalorder 1, %s16
      %p119 = scmp.lt.s32.totalorder %s16, 3
      %p120 = pnand %p118, %p119
      %p121 = pneg %p120
      // Predicated region
      $region9: #{tpu_custom_call.1} parent=5 // pred_check
        _
      $region10: #{tpu_custom_call.1} parent=5 // pred_check_branch
        %123 = sbr.rel (%p120) target = $region12
      $region11: #{tpu_custom_call.1} parent=5 // pred_region
        %s124 = ssub.s32 %s16, 1
        // Predicated region
        $region13: #{tpu_custom_call.1} parent=11 // pred_check
          %p125 = pneg %p63
        $region14: #{tpu_custom_call.1} parent=11 // pred_check_branch
          %127 = sbr.rel (%p125) target = $region16
        $region15: #{tpu_custom_call.1} parent=11 // pred_region
          %s129 = ssub.s32 256, 256
          %130 = vsyncadd [#allocation6], %s129
          %s131 = sshll.u32 [#allocation5], 4
          %s132 = int_to_ptr.vmem [resolvable:$true] %s131
          %137 = dma.hbm_to_vmem [thread:$0]  %s1, 256, %s132, [#allocation6], 64, 64, 4
        $region16: #{tpu_custom_call.1} parent=11 // pred_fallthru
          _
        // Predicated region
        $region17: #{tpu_custom_call.1} parent=11 // pred_check
          %p138 = pneg %p84
        $region18: #{tpu_custom_call.1} parent=11 // pred_check_branch
          %140 = sbr.rel (%p138) target = $region20
        $region19: #{tpu_custom_call.1} parent=11 // pred_region
          _
        $region20: #{tpu_custom_call.1} parent=11 // pred_fallthru
          _
      $region12: #{tpu_custom_call.1} parent=5 // pred_fallthru
        _
      %p141 = scmp.lt.s32.totalorder %s16, 2
      // Predicated region
      $region21: #{tpu_custom_call.1} parent=5 // pred_check
        %p142 = pneg %p141
      $region22: #{tpu_custom_call.1} parent=5 // pred_check_branch
        %144 = sbr.rel (%p142) target = $region24
      $region23: #{tpu_custom_call.1} parent=5 // pred_region
        // Predicated region
        $region25: #{tpu_custom_call.1} parent=23 // pred_check
          %p145 = pneg %p36
        $region26: #{tpu_custom_call.1} parent=23 // pred_check_branch
          %147 = sbr.rel (%p145) target = $region28
        $region27: #{tpu_custom_call.1} parent=23 // pred_region
          %s148 = sand.u32 %s26, 1
          %s149 = scalar_lea.sflag [#allocation3], %s148
          %s150 = sand.u32 %s26, 1
          %s151 = smul.addr %s150, 8
          %s152 = scalar_lea.vmem [#allocation2], %s151
          %s154 = ssub.s32 128, 128
          %155 = vsyncadd %s149, %s154
          %s156 = smul.addr %s16, 128
          %s157 = scalar_lea.hbm %s0, %s156
          %s159 = sshll.u32 %s152, 4
          %s160 = int_to_ptr.vmem [resolvable:$true] %s159
          %162 = dma.hbm_to_vmem [thread:$0]  %s157, 128, %s160, %s149
        $region28: #{tpu_custom_call.1} parent=23 // pred_fallthru
          _
      $region24: #{tpu_custom_call.1} parent=5 // pred_fallthru
        _
      %p163 = scmp.le.s32.totalorder 1, %s16
      %p164 = scmp.lt.s32.totalorder %s16, 3
      %p165 = pnand %p163, %p164
      %p166 = pneg %p165
      // Predicated region
      $region29: #{tpu_custom_call.1} parent=5 // pred_check
        _
      $region30: #{tpu_custom_call.1} parent=5 // pred_check_branch
        %168 = sbr.rel (%p165) target = $region32
      $region31: #{tpu_custom_call.1} parent=5 // pred_region
        %s169 = ssub.s32 %s16, 1
        %s170 = sand.u32 %s29, 1
        %s171 = scalar_lea.sflag [#allocation3], %s170
        %s172 = sand.u32 %s29, 1
        %s173 = smul.addr %s172, 8
        %s174 = scalar_lea.vmem [#allocation2], %s173
        // Predicated region
        $region33: #{tpu_custom_call.1} parent=31 // pred_check
          %p175 = pneg %p42
        $region34: #{tpu_custom_call.1} parent=31 // pred_check_branch
          %177 = sbr.rel (%p175) target = $region36
        $region35: #{tpu_custom_call.1} parent=31 // pred_region
          %178 = dma.done %s171, 128
        $region36: #{tpu_custom_call.1} parent=31 // pred_fallthru
          _
        // Predicated region
        $region37: #{tpu_custom_call.1} parent=31 // pred_check
          %p179 = pneg %p63
        $region38: #{tpu_custom_call.1} parent=31 // pred_check_branch
          %181 = sbr.rel (%p179) target = $region40
        $region39: #{tpu_custom_call.1} parent=31 // pred_region
          %182 = dma.done [#allocation6], 256
        $region40: #{tpu_custom_call.1} parent=31 // pred_fallthru
          _
        %s183 = sand.u32 %s29, 1
        %s184 = scalar_lea.sflag [#allocation3], %s183
        %s185 = sand.u32 %s29, 1
        %s186 = smul.addr %s185, 8
        %s187 = scalar_lea.vmem [#allocation2], %s186
        %p188 = pneg %p42
        %p189 = pneg %p39
        %p190 = pneg %p63
        %p191 = pneg %p60
        %p192 = pneg %p84
        %p193 = pneg %p81
        %p194 = pneg %p110
        %p195 = pneg %p107
        %s196 = sand.u32 %s97, 1
        %s197 = scalar_lea.sflag [#allocation4], %s196
        %s198 = sand.u32 %s97, 1
        %s199 = smul.addr %s198, 8
        %s200 = scalar_lea.vmem [#allocation7], %s199
        %v202 = vld [vmem:[%s174] sm:$0xff]
        %v203 = vpack.c.bf16 %v202, %v202
        %v204 = vld [vmem:[#allocation5] sm:$0xf]
        %v205 = vld [vmem:[#allocation5 + $0x4] sm:$0xf]
        %v206 = vld [vmem:[#allocation5 + $0x8] sm:$0xf]
        %v207 = vld [vmem:[#allocation5 + $0xc] sm:$0xf]
        %v208 = vld [vmem:[%s2] sm:$0x1]
        %v210 = vlaneseq
        %v211 = vshrl.u32 %v210, 7
        %v212 = vsub.s32 0, %v211
        %v213 = vrot.slane %v208, %v212
        %v219 = vunpack.c.l.b16 %v204
        %v220 = vunpack.c.l.b16 %v205
        %v221 = vunpack.c.l.b16 %v206
        %v222 = vunpack.c.l.b16 %v207
        %v223 = vpack.c.b16 %v220, %v219
        %v224 = vpack.c.b16 %v222, %v221
        %vm227 = vcmask 261120
        %v229 = vsel %vm227, %v203, 0
        %231 = vmatprep.subr.bf16.mxu0 0
        %232 = vmatpush1.bf16.msra.mxu0 %v223
        %233 = vmatprep.subr.bf16.mxu0 0
        %234 = vmatpush1.bf16.msra.mxu0 %v224
        %235 = vmatprep.subr.bf16.mxu0 0
        %236 = vmatpush1.bf16.msra.mxu0 0
        %237 = vmatprep.subr.bf16.mxu0 0
        %238 = vmatpush1.bf16.msra.mxu0 0
        %239 = vmatprep.subr.bf16.mxu0 0
        %240 = vmatpush1.bf16.msra.mxu0 0
        %241 = vmatprep.subr.bf16.mxu0 0
        %242 = vmatpush1.bf16.msra.mxu0 0
        %243 = vmatprep.subr.bf16.mxu0 0
        %244 = vmatpush1.bf16.msra.mxu0 0
        %245 = vmatprep.subr.bf16.mxu0 0
        %246 = vmatpush1.bf16.msra.mxu0 0
        %247 = vmatprep.subr.bf16.mxu0 0
        %248 = vmatpush1.bf16.msra.mxu0 0
        %249 = vmatprep.subr.bf16.mxu0 0
        %250 = vmatpush1.bf16.msra.mxu0 0
        %251 = vmatprep.subr.bf16.mxu0 0
        %252 = vmatpush1.bf16.msra.mxu0 0
        %253 = vmatprep.subr.bf16.mxu0 0
        %254 = vmatpush1.bf16.msra.mxu0 0
        %255 = vmatprep.subr.bf16.mxu0 0
        %256 = vmatpush1.bf16.msra.mxu0 0
        %257 = vmatprep.subr.bf16.mxu0 0
        %258 = vmatpush1.bf16.msra.mxu0 0
        %259 = vmatprep.subr.bf16.mxu0 0
        %260 = vmatpush1.bf16.msra.mxu0 0
        %261 = vmatprep.subr.bf16.mxu0 0
        %262 = vmatpush1.bf16.msra.mxu0 0
        %263 = vmatprep.mubr.bf16.mxu0 0
        %264 = vmatmul.mubr.bf16.gmra.mrb[0].mxu0 %v229
        %v265 = vpop.f32.mrb[0].mxu0
        %v266 = vadd.f32 %v213, %v265
        %v267 = vpop.f32.mrb[0].mxu0
        %v268 = vpop.f32.mrb[0].mxu0
        %v269 = vpop.f32.mrb[0].mxu0
        %270 = vdwg.mxu0
        %v271 = vsub.f32 0.0, %v266
        %v272 = vmul.f32 %v271, 1.442695
        %v273 = vpow.pop %v272
        %v274 = vadd.f32 %v273, 1.0
        %v275 = vrcp.pop %v274
        %v276 = vmul.f32 %v266, %v275
        %v277 = vadd.f32 %v202, %v276
        %278 = vst.msk [vmem:[%s200] sm:$0xff] %vm227, %v277
        %s279 = sand.u32 %s97, 1
        %s280 = scalar_lea.sflag [#allocation4], %s279
        %s281 = sand.u32 %s97, 1
        %s282 = smul.addr %s281, 8
        %s283 = scalar_lea.vmem [#allocation7], %s282
        // Predicated region
        $region41: #{tpu_custom_call.1} parent=31 // pred_check
          %p284 = pneg %p107
        $region42: #{tpu_custom_call.1} parent=31 // pred_check_branch
          %286 = sbr.rel (%p284) target = $region44
        $region43: #{tpu_custom_call.1} parent=31 // pred_region
          %s288 = ssub.s32 128, 128
          %289 = vsyncadd %s280, %s288
          %s290 = smul.addr %s21, 128
          %s291 = scalar_lea.hbm %s3, %s290
          %s293 = sshll.u32 %s283, 4
          %s294 = int_to_ptr.vmem [resolvable:$true] %s293
          %296 = dma.vmem_to_hbm [thread:$0]  %s294, 128, %s291, %s280
        $region44: #{tpu_custom_call.1} parent=31 // pred_fallthru
          _
      $region32: #{tpu_custom_call.1} parent=5 // pred_fallthru
        _
      %p297 = scmp.le.s32.totalorder 2, %s16
      // Predicated region
      $region45: #{tpu_custom_call.1} parent=5 // pred_check
        %p298 = pneg %p297
      $region46: #{tpu_custom_call.1} parent=5 // pred_check_branch
        %300 = sbr.rel (%p298) target = $region48
      $region47: #{tpu_custom_call.1} parent=5 // pred_region
        %s301 = ssub.s32 %s16, 2
        // Predicated region
        $region49: #{tpu_custom_call.1} parent=47 // pred_check
          %p302 = pneg %p113
        $region50: #{tpu_custom_call.1} parent=47 // pred_check_branch
          %304 = sbr.rel (%p302) target = $region52
        $region51: #{tpu_custom_call.1} parent=47 // pred_region
          %s305 = sand.u32 %s98, 1
          %s306 = scalar_lea.sflag [#allocation4], %s305
          %s307 = sand.u32 %s98, 1
          %s308 = smul.addr %s307, 8
          %s309 = scalar_lea.vmem [#allocation7], %s308
          %310 = dma.done %s306, 128
        $region52: #{tpu_custom_call.1} parent=47 // pred_fallthru
          _
      $region48: #{tpu_custom_call.1} parent=5 // pred_fallthru
        _
    $region6: #{tpu_custom_call.1} parent=1 // loop_footer
      %s20 = sadd.s32 1, %s16
    $region7: #{tpu_custom_call.1} parent=1 // loop_footer_branch
      %15 = sbr.rel target = $region3
    $region8: #{tpu_custom_call.1} parent=1 // loop_exit
      _
    %311 = vsyncpa [#allocation3], 1
    %s312 = scalar_lea.sflag [#allocation3], 1
    %313 = vsyncpa %s312, 1
    %314 = vsyncpa [#allocation6], 1
    %315 = vsyncpa [#allocation4], 1
    %s316 = scalar_lea.sflag [#allocation4], 1
    %317 = vsyncpa %s316, 1

// kernel: tpu_custom_call.1
$region0: #{tpu_custom_call.1}
  #allocation0 [shape = 'u32[]', space=smem, size = 0x4, offset = 0x4, fixed_abs, tag = 'smem constant byte address 0x4 - core index']
  #allocation1 [shape = 'u32[144,128]{1,0:T(1,128)}', space=vmem, size = 0x12000, scoped, tag = 'internal scratch']
  %s0 = inlined_call_operand.hbm [shape: f32[16,32], index: 0, kind: input, shape index: {}]
  %s1 = inlined_call_operand.hbm [shape: bf16[32,32], index: 1, kind: input, shape index: {}]
  %s2 = inlined_call_operand.vmem [shape: f32[1,32], index: 2, kind: input, shape index: {}]
  %s3 = inlined_call_operand.hbm [shape: f32[16,32], index: 3, kind: output, shape index: {}]
  %s4 = sld [smem:[#allocation0]]
  $region53: #{tpu_custom_call.1} parent=0
    _
  %s6 = ssub.s32 1, %s4
  %s7 = scalar_select 0, %s6, %s4
  $region1: #{tpu_custom_call.1} parent=0
    #allocation2 [shape = 'u8[8192]{0}', space=vmem, size = 0x2000, scoped, tag = 'input window, operand 0']
    #allocation3 [shape = 's32[2]{0}', space=sflag, size = 0x8, scoped, tag = 'scoped memory for tpu_custom_call.1']
    #allocation4 [shape = 's32[2]{0}', space=sflag, size = 0x8, scoped, tag = 'scoped memory for tpu_custom_call.1']
    #allocation5 [shape = 'u8[8192]{0}', space=vmem, size = 0x2000, scoped, tag = 'input window, operand 1, single buffered']
    #allocation6 [shape = 's32[1]{0}', space=sflag, size = 0x4, scoped, tag = 'scoped memory for tpu_custom_call.1']
    #allocation7 [shape = 'u8[8192]{0}', space=vmem, size = 0x2000, scoped, tag = 'output window, operand 0']
    %8 = vsyncpa [#allocation3], 0
    %s9 = scalar_lea.sflag [#allocation3], 1
    %10 = vsyncpa %s9, 0
    %11 = vsyncpa [#allocation6], 0
    %12 = vsyncpa [#allocation4], 0
    %s13 = scalar_lea.sflag [#allocation4], 1
    %14 = vsyncpa %s13, 0
    loop: start=0, step=1, limit=4
    $region2: #{tpu_custom_call.1} parent=1 // loop_pre_header
      _
    $region3: #{tpu_custom_call.1} parent=1 // loop_header
      %s16 = sphi 0, %s20
      %p17 = scmp.ge.s32.totalorder %s16, 4
      %s26 = sphi 0, %s28
      %s29 = sphi 0, %s26
      %s30 = sphi 0, %s29
      %s46 = sphi 0, %s30
      %s50 = sphi 0, %s50
      %s52 = sphi 0, %s50
      %s53 = sphi 0, %s52
      %s67 = sphi 0, %s53
      %s71 = sphi 0, %s71
      %s73 = sphi 0, %s71
      %s74 = sphi 0, %s73
      %s88 = sphi 0, %s74
      %s94 = sphi 0, %s96
      %s97 = sphi 0, %s94
      %s98 = sphi 0, %s97
      %s114 = sphi 0, %s98
    $region4: #{tpu_custom_call.1} parent=1 // loop_header_branch
      %19 = sbr.rel (%p17) target = $region8
    $region5: #{tpu_custom_call.1} parent=1 // loop_body
      %s21 = ssub.s32 %s16, 1
      %s22 = ssub.s32 %s16, 2
      %s23 = sadd.s32 %s16, 1
      %s24 = ssub.s32 %s16, %s23
      %p25 = scmp.eq.s32.totalorder %s24, 0
      %s27 = sadd.s32 %s26, 1
      %s28 = scalar_select %p25, %s26, %s27
      %p31 = pneg %p25
      %p32 = scmp.eq.s32.totalorder %s16, 1
      %p33 = por %p31, %p32
      %p34 = scmp.ne.s32.totalorder %s26, %s29
      %p35 = scmp.eq.s32.totalorder %s16, 0
      %p36 = por %p34, %p35
      %p37 = scmp.ne.s32.totalorder %s26, %s29
      %p38 = scmp.eq.s32.totalorder %s21, 1
      %p39 = por %p37, %p38
      %p40 = scmp.ne.s32.totalorder %s29, %s30
      %p41 = scmp.eq.s32.totalorder %s21, 0
      %p42 = por %p40, %p41
      %p43 = scmp.ne.s32.totalorder %s29, %s30
      %p44 = scmp.eq.s32.totalorder %s22, 1
      %p45 = por %p43, %p44
      %p47 = scmp.ne.s32.totalorder %s30, %s46
      %p48 = scmp.eq.s32.totalorder %s22, 0
      %p49 = por %p47, %p48
      %s51 = sadd.s32 %s50, 1
      %p54 = scmp.eq.s32.totalorder %s16, 1
      %p55 = scmp.ne.s32.totalorder %s50, %s52
      %p56 = scmp.eq.s32.totalorder %s16, 0
      %p57 = por %p55, %p56
      %p58 = scmp.ne.s32.totalorder %s50, %s52
      %p59 = scmp.eq.s32.totalorder %s21, 1
      %p60 = por %p58, %p59
      %p61 = scmp.ne.s32.totalorder %s52, %s53
      %p62 = scmp.eq.s32.totalorder %s21, 0
      %p63 = por %p61, %p62
      %p64 = scmp.ne.s32.totalorder %s52, %s53
      %p65 = scmp.eq.s32.totalorder %s22, 1
      %p66 = por %p64, %p65
      %p68 = scmp.ne.s32.totalorder %s53, %s67
      %p69 = scmp.eq.s32.totalorder %s22, 0
      %p70 = por %p68, %p69
      %s72 = sadd.s32 %s71, 1
      %p75 = scmp.eq.s32.totalorder %s16, 1
      %p76 = scmp.ne.s32.totalorder %s71, %s73
      %p77 = scmp.eq.s32.totalorder %s16, 0
      %p78 = por %p76, %p77
      %p79 = scmp.ne.s32.totalorder %s71, %s73
      %p80 = scmp.eq.s32.totalorder %s21, 1
      %p81 = por %p79, %p80
      %p82 = scmp.ne.s32.totalorder %s73, %s74
      %p83 = scmp.eq.s32.totalorder %s21, 0
      %p84 = por %p82, %p83
      %p85 = scmp.ne.s32.totalorder %s73, %s74
      %p86 = scmp.eq.s32.totalorder %s22, 1
      %p87 = por %p85, %p86
      %p89 = scmp.ne.s32.totalorder %s74, %s88
      %p90 = scmp.eq.s32.totalorder %s22, 0
      %p91 = por %p89, %p90
      %s92 = ssub.s32 %s16, %s23
      %p93 = scmp.eq.s32.totalorder %s92, 0
      %s95 = sadd.s32 %s94, 1
      %s96 = scalar_select %p93, %s94, %s95
      %p99 = pneg %p93
      %p100 = scmp.eq.s32.totalorder %s16, 1
      %p101 = por %p99, %p100
      %p102 = scmp.ne.s32.totalorder %s94, %s97
      %p103 = scmp.eq.s32.totalorder %s16, 0
      %p104 = por %p102, %p103
      %p105 = scmp.ne.s32.totalorder %s94, %s97
      %p106 = scmp.eq.s32.totalorder %s21, 1
      %p107 = por %p105, %p106
      %p108 = scmp.ne.s32.totalorder %s97, %s98
      %p109 = scmp.eq.s32.totalorder %s21, 0
      %p110 = por %p108, %p109
      %p111 = scmp.ne.s32.totalorder %s97, %s98
      %p112 = scmp.eq.s32.totalorder %s22, 1
      %p113 = por %p111, %p112
      %p115 = scmp.ne.s32.totalorder %s98, %s114
      %p116 = scmp.eq.s32.totalorder %s22, 0
      %p117 = por %p115, %p116
      %p118 = scmp.le.s32.totalorder 1, %s16
      %p119 = scmp.lt.s32.totalorder %s16, 3
      %p120 = pnand %p118, %p119
      %p121 = pneg %p120
      // Predicated region
      $region9: #{tpu_custom_call.1} parent=5 // pred_check
        _
      $region10: #{tpu_custom_call.1} parent=5 // pred_check_branch
        %123 = sbr.rel (%p120) target = $region12
      $region11: #{tpu_custom_call.1} parent=5 // pred_region
        %s124 = ssub.s32 %s16, 1
        // Predicated region
        $region13: #{tpu_custom_call.1} parent=11 // pred_check
          %p125 = pneg %p63
        $region14: #{tpu_custom_call.1} parent=11 // pred_check_branch
          %127 = sbr.rel (%p125) target = $region16
        $region15: #{tpu_custom_call.1} parent=11 // pred_region
          %s129 = ssub.s32 256, 256
          %130 = vsyncadd [#allocation6], %s129
          %s131 = sshll.u32 [#allocation5], 4
          %s132 = int_to_ptr.vmem [resolvable:$true] %s131
          %137 = dma.hbm_to_vmem [thread:$0]  %s1, 256, %s132, [#allocation6], 64, 64, 4
        $region16: #{tpu_custom_call.1} parent=11 // pred_fallthru
          _
        // Predicated region
        $region17: #{tpu_custom_call.1} parent=11 // pred_check
          %p138 = pneg %p84
        $region18: #{tpu_custom_call.1} parent=11 // pred_check_branch
          %140 = sbr.rel (%p138) target = $region20
        $region19: #{tpu_custom_call.1} parent=11 // pred_region
          _
        $region20: #{tpu_custom_call.1} parent=11 // pred_fallthru
          _
      $region12: #{tpu_custom_call.1} parent=5 // pred_fallthru
        _
      %p141 = scmp.lt.s32.totalorder %s16, 2
      // Predicated region
      $region21: #{tpu_custom_call.1} parent=5 // pred_check
        %p142 = pneg %p141
      $region22: #{tpu_custom_call.1} parent=5 // pred_check_branch
        %144 = sbr.rel (%p142) target = $region24
      $region23: #{tpu_custom_call.1} parent=5 // pred_region
        // Predicated region
        $region25: #{tpu_custom_call.1} parent=23 // pred_check
          %p145 = pneg %p36
        $region26: #{tpu_custom_call.1} parent=23 // pred_check_branch
          %147 = sbr.rel (%p145) target = $region28
        $region27: #{tpu_custom_call.1} parent=23 // pred_region
          %s148 = sand.u32 %s26, 1
          %s149 = scalar_lea.sflag [#allocation3], %s148
          %s150 = sand.u32 %s26, 1
          %s151 = smul.addr %s150, 8
          %s152 = scalar_lea.vmem [#allocation2], %s151
          %s154 = ssub.s32 128, 128
          %155 = vsyncadd %s149, %s154
          %s156 = smul.addr %s16, 128
          %s157 = scalar_lea.hbm %s0, %s156
          %s159 = sshll.u32 %s152, 4
          %s160 = int_to_ptr.vmem [resolvable:$true] %s159
          %162 = dma.hbm_to_vmem [thread:$0]  %s157, 128, %s160, %s149
        $region28: #{tpu_custom_call.1} parent=23 // pred_fallthru
          _
      $region24: #{tpu_custom_call.1} parent=5 // pred_fallthru
        _
      %p163 = scmp.le.s32.totalorder 1, %s16
      %p164 = scmp.lt.s32.totalorder %s16, 3
      %p165 = pnand %p163, %p164
      %p166 = pneg %p165
      // Predicated region
      $region29: #{tpu_custom_call.1} parent=5 // pred_check
        _
      $region30: #{tpu_custom_call.1} parent=5 // pred_check_branch
        %168 = sbr.rel (%p165) target = $region32
      $region31: #{tpu_custom_call.1} parent=5 // pred_region
        %s169 = ssub.s32 %s16, 1
        %s170 = sand.u32 %s29, 1
        %s171 = scalar_lea.sflag [#allocation3], %s170
        %s172 = sand.u32 %s29, 1
        %s173 = smul.addr %s172, 8
        %s174 = scalar_lea.vmem [#allocation2], %s173
        // Predicated region
        $region33: #{tpu_custom_call.1} parent=31 // pred_check
          %p175 = pneg %p42
        $region34: #{tpu_custom_call.1} parent=31 // pred_check_branch
          %177 = sbr.rel (%p175) target = $region36
        $region35: #{tpu_custom_call.1} parent=31 // pred_region
          %178 = dma.done %s171, 128
        $region36: #{tpu_custom_call.1} parent=31 // pred_fallthru
          _
        // Predicated region
        $region37: #{tpu_custom_call.1} parent=31 // pred_check
          %p179 = pneg %p63
        $region38: #{tpu_custom_call.1} parent=31 // pred_check_branch
          %181 = sbr.rel (%p179) target = $region40
        $region39: #{tpu_custom_call.1} parent=31 // pred_region
          %182 = dma.done [#allocation6], 256
        $region40: #{tpu_custom_call.1} parent=31 // pred_fallthru
          _
        %s183 = sand.u32 %s29, 1
        %s184 = scalar_lea.sflag [#allocation3], %s183
        %s185 = sand.u32 %s29, 1
        %s186 = smul.addr %s185, 8
        %s187 = scalar_lea.vmem [#allocation2], %s186
        %p188 = pneg %p42
        %p189 = pneg %p39
        %p190 = pneg %p63
        %p191 = pneg %p60
        %p192 = pneg %p84
        %p193 = pneg %p81
        %p194 = pneg %p110
        %p195 = pneg %p107
        %s196 = sand.u32 %s97, 1
        %s197 = scalar_lea.sflag [#allocation4], %s196
        %s198 = sand.u32 %s97, 1
        %s199 = smul.addr %s198, 8
        %s200 = scalar_lea.vmem [#allocation7], %s199
        %v202 = vld [vmem:[%s174] sm:$0xff]
        %v203 = vpack.c.bf16 %v202, %v202
        %v204 = vld [vmem:[#allocation5] sm:$0xf]
        %v205 = vld [vmem:[#allocation5 + $0x4] sm:$0xf]
        %v206 = vld [vmem:[#allocation5 + $0x8] sm:$0xf]
        %v207 = vld [vmem:[#allocation5 + $0xc] sm:$0xf]
        %v208 = vld [vmem:[%s2] sm:$0x1]
        %v210 = vlaneseq
        %v211 = vshrl.u32 %v210, 7
        %v212 = vsub.s32 0, %v211
        %v213 = vrot.slane %v208, %v212
        %v219 = vunpack.c.l.b16 %v204
        %v220 = vunpack.c.l.b16 %v205
        %v221 = vunpack.c.l.b16 %v206
        %v222 = vunpack.c.l.b16 %v207
        %v223 = vpack.c.b16 %v220, %v219
        %v224 = vpack.c.b16 %v222, %v221
        %vm227 = vcmask 261120
        %v229 = vsel %vm227, %v203, 0
        %231 = vmatprep.subr.bf16.mxu0 0
        %232 = vmatpush1.bf16.msra.mxu0 %v223
        %233 = vmatprep.subr.bf16.mxu0 0
        %234 = vmatpush1.bf16.msra.mxu0 %v224
        %235 = vmatprep.subr.bf16.mxu0 0
        %236 = vmatpush1.bf16.msra.mxu0 0
        %237 = vmatprep.subr.bf16.mxu0 0
        %238 = vmatpush1.bf16.msra.mxu0 0
        %239 = vmatprep.subr.bf16.mxu0 0
        %240 = vmatpush1.bf16.msra.mxu0 0
        %241 = vmatprep.subr.bf16.mxu0 0
        %242 = vmatpush1.bf16.msra.mxu0 0
        %243 = vmatprep.subr.bf16.mxu0 0
        %244 = vmatpush1.bf16.msra.mxu0 0
        %245 = vmatprep.subr.bf16.mxu0 0
        %246 = vmatpush1.bf16.msra.mxu0 0
        %247 = vmatprep.subr.bf16.mxu0 0
        %248 = vmatpush1.bf16.msra.mxu0 0
        %249 = vmatprep.subr.bf16.mxu0 0
        %250 = vmatpush1.bf16.msra.mxu0 0
        %251 = vmatprep.subr.bf16.mxu0 0
        %252 = vmatpush1.bf16.msra.mxu0 0
        %253 = vmatprep.subr.bf16.mxu0 0
        %254 = vmatpush1.bf16.msra.mxu0 0
        %255 = vmatprep.subr.bf16.mxu0 0
        %256 = vmatpush1.bf16.msra.mxu0 0
        %257 = vmatprep.subr.bf16.mxu0 0
        %258 = vmatpush1.bf16.msra.mxu0 0
        %259 = vmatprep.subr.bf16.mxu0 0
        %260 = vmatpush1.bf16.msra.mxu0 0
        %261 = vmatprep.subr.bf16.mxu0 0
        %262 = vmatpush1.bf16.msra.mxu0 0
        %263 = vmatprep.mubr.bf16.mxu0 0
        %264 = vmatmul.mubr.bf16.gmra.mrb[0].mxu0 %v229
        %v265 = vpop.f32.mrb[0].mxu0
        %v266 = vadd.f32 %v213, %v265
        %v267 = vpop.f32.mrb[0].mxu0
        %v268 = vpop.f32.mrb[0].mxu0
        %v269 = vpop.f32.mrb[0].mxu0
        %270 = vdwg.mxu0
        %v271 = vsub.f32 0.0, %v266
        %v272 = vmul.f32 %v271, 1.442695
        %v273 = vpow.pop %v272
        %v274 = vadd.f32 %v273, 1.0
        %v275 = vrcp.pop %v274
        %v276 = vmul.f32 %v266, %v275
        %v277 = vadd.f32 %v202, %v276
        %278 = vst.msk [vmem:[%s200] sm:$0xff] %vm227, %v277
        %s279 = sand.u32 %s97, 1
        %s280 = scalar_lea.sflag [#allocation4], %s279
        %s281 = sand.u32 %s97, 1
        %s282 = smul.addr %s281, 8
        %s283 = scalar_lea.vmem [#allocation7], %s282
        // Predicated region
        $region41: #{tpu_custom_call.1} parent=31 // pred_check
          %p284 = pneg %p107
        $region42: #{tpu_custom_call.1} parent=31 // pred_check_branch
          %286 = sbr.rel (%p284) target = $region44
        $region43: #{tpu_custom_call.1} parent=31 // pred_region
          %s288 = ssub.s32 128, 128
          %289 = vsyncadd %s280, %s288
          %s290 = smul.addr %s21, 128
          %s291 = scalar_lea.hbm %s3, %s290
          %s293 = sshll.u32 %s283, 4
          %s294 = int_to_ptr.vmem [resolvable:$true] %s293
          %296 = dma.vmem_to_hbm [thread:$0]  %s294, 128, %s291, %s280
        $region44: #{tpu_custom_call.1} parent=31 // pred_fallthru
          _
      $region32: #{tpu_custom_call.1} parent=5 // pred_fallthru
        _
      %p297 = scmp.le.s32.totalorder 2, %s16
      // Predicated region
      $region45: #{tpu_custom_call.1} parent=5 // pred_check
        %p298 = pneg %p297
      $region46: #{tpu_custom_call.1} parent=5 // pred_check_branch
        %300 = sbr.rel (%p298) target = $region48
      $region47: #{tpu_custom_call.1} parent=5 // pred_region
        %s301 = ssub.s32 %s16, 2
        // Predicated region
        $region49: #{tpu_custom_call.1} parent=47 // pred_check
          %p302 = pneg %p113
        $region50: #{tpu_custom_call.1} parent=47 // pred_check_branch
          %304 = sbr.rel (%p302) target = $region52
        $region51: #{tpu_custom_call.1} parent=47 // pred_region
          %s305 = sand.u32 %s98, 1
          %s306 = scalar_lea.sflag [#allocation4], %s305
          %s307 = sand.u32 %s98, 1
          %s308 = smul.addr %s307, 8
          %s309 = scalar_lea.vmem [#allocation7], %s308
          %310 = dma.done %s306, 128
        $region52: #{tpu_custom_call.1} parent=47 // pred_fallthru
          _
      $region48: #{tpu_custom_call.1} parent=5 // pred_fallthru
        _
    $region6: #{tpu_custom_call.1} parent=1 // loop_footer
      %s20 = sadd.s32 1, %s16
    $region7: #{tpu_custom_call.1} parent=1 // loop_footer_branch
      %15 = sbr.rel target = $region3
    $region8: #{tpu_custom_call.1} parent=1 // loop_exit
      _
    %311 = vsyncpa [#allocation3], 1
    %s312 = scalar_lea.sflag [#allocation3], 1
    %313 = vsyncpa %s312, 1
    %314 = vsyncpa [#allocation6], 1
    %315 = vsyncpa [#allocation4], 1
    %s316 = scalar_lea.sflag [#allocation4], 1
    %317 = vsyncpa %s316, 1

</llo_original>
